<compile_context>
chip_gen: v7x
topology: tpu7x:2x2x1
jax: 0.10.0
libtpu: 0.0.40
codegen_flags: <defaults>
</compile_context>

<pallas_src>
import math

import jax
import jax.numpy as jnp
import numpy as np
from jax.experimental import pallas as pl
from jax.experimental.pallas import tpu as pltpu


_EPS_SQ = 1e-24  # (F.normalize eps = 1e-12)**2; rsqrt(max(ss, eps^2)) == 1/max(||x||, eps)


def _round_up(x, m):
    return ((x + m - 1) // m) * m


def _tpu_vmem_bytes():
    try:
        info = pltpu.get_tpu_info()
        v = getattr(info, "vmem_capacity_bytes", None)
        if v:
            return int(v)
    except Exception:
        pass
    return 64 << 20  # conservative default (v7x-sized)


def _budgets():
    """(per-step working-set target, vmem_limit cap, max batch tile) per generation."""
    vmem = _tpu_vmem_bytes()
    if vmem >= (100 << 20):            # v5e / v6e: 128 MiB VMEM per TensorCore
        return 100 << 20, 110 << 20, 512
    return 44 << 20, 56 << 20, 256     # v7x (64 MiB) / unknown: leave headroom


def _pick_bm(batch, per_row_bytes, budget, bm_max):
    """Batch tile: largest that fits the VMEM budget, gives >=2 tiles when the
    batch allows (keeps both v7x TensorCores busy; free elsewhere), and avoids
    gross batch padding (>~12.5% padded rows)."""
    bm = bm_max
    while bm > 8 and bm * per_row_bytes > budget:
        bm //= 2
    half = _round_up(max(-(-batch // 2), 1), 8)
    bm = max(8, min(bm, half))
    while bm > 8 and (_round_up(batch, bm) - batch) * 8 > batch:
        bm = max(8, _round_up(bm // 2, 8))
    return bm


# -----------------------------------------------------------------------------
# Kernels
# -----------------------------------------------------------------------------
def _weight_norm_kernel(w_ref, wn_ref):
    """Row-normalize one (ow, F) weight tile; emit bf16 rows for the MXU."""
    w = w_ref[...].astype(jnp.float32)
    inv = jax.lax.rsqrt(jnp.maximum(jnp.sum(w * w, axis=-1, keepdims=True), _EPS_SQ))
    wn_ref[...] = (w * inv).astype(jnp.bfloat16)


def _cosine_resident_kernel(sigma_ref, x_ref, wt_ref, out_ref):
    """Whole bf16 (F, O_pad) weight resident in VMEM; one grid step per batch tile.
    L2-normalize the batch tile (f32), matmul on MXU with f32 accumulation,
    scale by sigma (SMEM scalar) in the epilogue."""
    x = x_ref[...].astype(jnp.float32)
    inv = jax.lax.rsqrt(jnp.maximum(jnp.sum(x * x, axis=-1, keepdims=True), _EPS_SQ))
    xn = (x * inv).astype(jnp.bfloat16)
    out_ref[...] = sigma_ref[0] * jnp.dot(
        xn, wt_ref[...], preferred_element_type=jnp.float32)


def _cosine_tiled_kernel(sigma_ref, x_ref, wt_ref, out_ref, xn_ref):
    """Large-weight fallback: output tiled over j; the normalized activation for
    batch tile i is computed once (j == 0) into VMEM scratch and reused."""
    @pl.when(pl.program_id(1) == 0)
    def _():
        x = x_ref[...].astype(jnp.float32)
        inv = jax.lax.rsqrt(
            jnp.maximum(jnp.sum(x * x, axis=-1, keepdims=True), _EPS_SQ))
        xn_ref[...] = (x * inv).astype(jnp.bfloat16)

    out_ref[...] = sigma_ref[0] * jnp.dot(
        xn_ref[...], wt_ref[...], preferred_element_type=jnp.float32)


# -----------------------------------------------------------------------------
# Wrappers
# -----------------------------------------------------------------------------
def normalize_weight_t(weight, limit_cap):
    """One-shot gridded L2 row-normalization of the (O, F) weight -> bf16,
    returned transposed as (F, O_pad) so the cosine matmul has no per-step
    transpose.  The final transpose is a tiny one-shot XLA op on bf16 data."""
    out_f, feat = weight.shape
    o_pad = _round_up(out_f, 128)
    w = weight.astype(jnp.float32)
    if o_pad != out_f:
        w = jnp.pad(w, ((0, o_pad - out_f), (0, 0)))

    ow = 256 if o_pad % 256 == 0 else 128
    # Keep the double-buffered f32-in + bf16-out working set under the cap
    # (matters on v5e's 16 MiB default scoped VMEM for large F).
    while ow > 8 and 2 * ow * feat * (4 + 2) + (2 << 20) > limit_cap:
        ow //= 2
    vmem_limit = int(min(limit_cap, max(8 << 20, 2 * ow * feat * 6 + (2 << 20))))

    wn = pl.pallas_call(
        _weight_norm_kernel,
        out_shape=jax.ShapeDtypeStruct((o_pad, feat), jnp.bfloat16),
        grid_spec=pltpu.PrefetchScalarGridSpec(
            num_scalar_prefetch=0,
            grid=(o_pad // ow,),
            in_specs=[pl.BlockSpec((ow, feat), lambda i: (i, 0))],
            out_specs=pl.BlockSpec((ow, feat), lambda i: (i, 0))),
        compiler_params=pltpu.CompilerParams(
            dimension_semantics=("parallel",),
            vmem_limit_bytes=vmem_limit),
    )(w)
    return wn.T  # (F, O_pad) bf16


def pool2x2(x_nchw, alpha):
    """alpha*maxpool2d(2) + (1-alpha)*avgpool2d(2), flattened to (B, C*H/2*W/2).
    Done in XLA (lane-friendly reshape + reductions): the cosine kernel is
    memory-bound, so avoiding 4x materialized f32 strided views is the win."""
    b, c, h, w = x_nchw.shape
    h2, w2 = h // 2, w // 2
    x = x_nchw[:, :, : 2 * h2, : 2 * w2]
    xw = x.reshape(b, c, h2, 2, w2, 2)
    xmax = jnp.max(xw, axis=(3, 5))
    xavg = jnp.mean(xw, axis=(3, 5))
    pooled = alpha * xmax + (1.0 - alpha) * xavg
    return pooled.reshape(b, c * h2 * w2)


def cosine_matmul(x2d, wt_pad, sigma_scale, out_features):
    """sigma_scale * cosine(x, w) as a (B, out_features) f32 array.
    x2d: (B, F) activation. wt_pad: (F, O_pad) bf16 row-normalized weight."""
    batch, feat = x2d.shape
    o_pad = wt_pad.shape[1]
    ws_target, limit_cap, bm_max = _budgets()

    x = x2d.astype(jnp.bfloat16)            # halves input DMA; norm recomputed in f32
    sigma_arr = jnp.reshape(jnp.asarray(sigma_scale, jnp.float32), (1,))

    w_bytes = 2 * feat * o_pad * 2           # bf16 weight, double-buffer allocation
    per_row_res = 2 * (feat * 2 + o_pad * 4)  # dbuf bf16 x-tile + dbuf f32 out-tile
    resident = (w_bytes + 32 * per_row_res) <= ws_target

    if resident:
        budget = ws_target - w_bytes
        bm = _pick_bm(batch, per_row_res, budget, bm_max)
        b_pad = _round_up(batch, bm)
        if b_pad != batch:
            x = jnp.pad(x, ((0, b_pad - batch), (0, 0)))
        vmem_limit = int(min(limit_cap,
                             max(8 << 20, w_bytes + bm * per_row_res + (2 << 20))))
        out = pl.pallas_call(
            _cosine_resident_kernel,
            out_shape=jax.ShapeDtypeStruct((b_pad, o_pad), jnp.float32),
            grid_spec=pltpu.PrefetchScalarGridSpec(
                num_scalar_prefetch=0,
                grid=(b_pad // bm,),
                in_specs=[pl.BlockSpec(memory_space=pltpu.MemorySpace.SMEM),   # sigma
                          pl.BlockSpec((bm, feat), lambda i: (i, 0)),          # x
                          pl.BlockSpec((feat, o_pad), lambda i: (0, 0))],      # wt (resident)
                out_specs=pl.BlockSpec((bm, o_pad), lambda i: (i, 0))),
            compiler_params=pltpu.CompilerParams(
                dimension_semantics=("parallel",),
                vmem_limit_bytes=vmem_limit),
        )(sigma_arr, x, wt_pad)
    else:
        on = 256 if o_pad % 256 == 0 else 128
        per_row = 2 * (feat * 2 + on * 4) + feat * 2   # x dbuf + out dbuf + xn scratch
        budget = ws_target - 2 * on * feat * 2          # minus dbuf weight tile
        bm = _pick_bm(batch, per_row, max(budget, 0), bm_max)
        b_pad = _round_up(batch, bm)
        if b_pad != batch:
            x = jnp.pad(x, ((0, b_pad - batch), (0, 0)))
        vmem_limit = int(min(limit_cap,
                             max(8 << 20, bm * per_row + 2 * on * feat * 2 + (2 << 20))))
        out = pl.pallas_call(
            _cosine_tiled_kernel,
            out_shape=jax.ShapeDtypeStruct((b_pad, o_pad), jnp.float32),
            grid_spec=pltpu.PrefetchScalarGridSpec(
                num_scalar_prefetch=0,
                grid=(b_pad // bm, o_pad // on),
                in_specs=[pl.BlockSpec(memory_space=pltpu.MemorySpace.SMEM),    # sigma
                          pl.BlockSpec((bm, feat), lambda i, j: (i, 0)),        # x
                          pl.BlockSpec((feat, on), lambda i, j: (0, j))],       # wt tile
                out_specs=pl.BlockSpec((bm, on), lambda i, j: (i, j)),
                scratch_shapes=[pltpu.VMEM((bm, feat), jnp.bfloat16)]),
            compiler_params=pltpu.CompilerParams(
                dimension_semantics=("parallel", "arbitrary"),
                vmem_limit_bytes=vmem_limit),
        )(sigma_arr, x, wt_pad)

    return out[:batch, :out_features]


def init_cosine_linear(key, in_features, out_features, sigma=True, pooling=False):
    """Deterministic parameter init mirroring CosineLinear.reset_parameters()."""
    kw, ka = jax.random.split(key, 2)
    stdv = 1.0 / math.sqrt(in_features)
    return {
        "weight": jax.random.uniform(
            kw, (out_features, in_features), jnp.float32, -stdv, stdv),
        "sigma": jnp.float32(1.0) if sigma else None,
        "alpha": jax.random.uniform(ka, (), jnp.float32) if pooling else None,
    }


def cosine_linear_forward(params, x, pooling=False, training=False):
    weight = params["weight"]
    out_features = weight.shape[0]
    _, limit_cap, _ = _budgets()
    wt_pad = normalize_weight_t(weight, limit_cap)   # hoisted: runs once per forward

    if pooling:
        x2d = pool2x2(x, params["alpha"])
    else:
        x2d = x.reshape(x.shape[0], -1)

    sigma = params["sigma"]
    if training:
        # Unscaled cosine head from the kernel; sigma head is trivial XLA glue.
        out = cosine_matmul(x2d, wt_pad, 1.0, out_features)
        out_s = out if sigma is None else sigma * out
        return {"wsigma": out_s, "wosigma": out}
    # Eval: sigma folded into the kernel epilogue -> single fused head.
    scale = 1.0 if sigma is None else sigma
    return cosine_matmul(x2d, wt_pad, scale, out_features)


# -----------------------------------------------------------------------------
# Demo / correctness check
# -----------------------------------------------------------------------------
if __name__ == "__main__":
    key = jax.random.PRNGKey(0)
    kx, kp = jax.random.split(key)

    B, C, H, W = 2, 4, 16, 16
    out_features = 10
    in_features = C * (H // 2) * (W // 2)          # 256 after 2x2 pooling

    x = jax.random.normal(kx, (B, C, H, W), dtype=jnp.float32)
    params = init_cosine_linear(kp, in_features, out_features,
                                sigma=True, pooling=True)

    # Eval-mode forward (sigma-scaled cosine logits), pooled path.
    out_s = cosine_linear_forward(params, x, pooling=True, training=False)
    out_s = jax.block_until_ready(out_s)

    # Training-mode forward returns both heads.
    out_dict = cosine_linear_forward(params, x, pooling=True, training=True)
    jax.block_until_ready(out_dict["wosigma"])

    # Pure-JAX f32 reference.
    a = params["alpha"]
    xw = x.reshape(B, C, H // 2, 2, W // 2, 2)
    pooled = a * jnp.max(xw, axis=(3, 5)) + (1.0 - a) * jnp.mean(xw, axis=(3, 5))
    pooled = pooled.reshape(B, -1)
    xn = pooled / jnp.maximum(jnp.linalg.norm(pooled, axis=1, keepdims=True), 1e-12)
    wn = params["weight"] / jnp.maximum(
        jnp.linalg.norm(params["weight"], axis=1, keepdims=True), 1e-12)
    cos_ref = xn @ wn.T
    ref = params["sigma"] * cos_ref

    # bf16 MXU operands with f32 accumulation: cosine logits within ~1e-2.
    TOL = 2e-2
    assert out_s.shape == (B, out_features)
    assert np.allclose(np.asarray(out_s), np.asarray(ref), atol=TOL), \
        "Pallas pooled output does not match reference"
    assert np.allclose(np.asarray(out_dict["wsigma"]), np.asarray(ref), atol=TOL)
    assert np.allclose(np.asarray(out_dict["wosigma"]), np.asarray(cos_ref), atol=TOL)

    # Non-pooling path (module with pooling=False), fed the reference pooled activation.
    out_np = cosine_linear_forward(
        {"weight": params["weight"], "sigma": params["sigma"], "alpha": None},
        pooled, pooling=False, training=False)
    out_np = jax.block_until_ready(out_np)
    assert np.allclose(np.asarray(out_np), np.asarray(ref), atol=TOL)

    print("KERNEL_OK")
</pallas_src>

<mosaic_0001>
module attributes {stable_mosaic.version = 11 : i64} {
  func.func @_weight_norm_kernel(%arg0: i32, %arg1: memref<128x256xf32, #tpu.memory_space<vmem>>, %arg2: memref<128x256xbf16, #tpu.memory_space<vmem>>) attributes {dimension_semantics = [#tpu.dimension_semantics<parallel>], iteration_bounds = array<i64: 1>, scalar_prefetch = 0 : i64, scratch_operands = 0 : i64, tpu.core_type = #tpu.core_type<tc>, window_params = [{transform_indices = @transform_0, window_bounds = array<i64: 128, 256>}, {transform_indices = @transform_1, window_bounds = array<i64: 128, 256>}]} {
    %c0 = arith.constant 0 : index
    %c0_0 = arith.constant 0 : index
    %0 = vector.load %arg1[%c0, %c0_0] : memref<128x256xf32, #tpu.memory_space<vmem>>, vector<128x256xf32>
    %1 = arith.mulf %0, %0 : vector<128x256xf32>
    %cst = arith.constant dense<0.000000e+00> : vector<128xf32>
    %2 = vector.multi_reduction <add>, %1, %cst [1] : vector<128x256xf32> to vector<128xf32>
    %3 = vector.shape_cast %2 : vector<128xf32> to vector<128x1xf32>
    %cst_1 = arith.constant 1.000000e-24 : f32
    %4 = vector.broadcast %cst_1 : f32 to vector<128x1xf32>
    %5 = arith.maximumf %3, %4 : vector<128x1xf32>
    %6 = math.rsqrt %5 : vector<128x1xf32>
    %7 = vector.broadcast %6 : vector<128x1xf32> to vector<128x256xf32>
    %8 = arith.mulf %0, %7 : vector<128x256xf32>
    %9 = arith.truncf %8 : vector<128x256xf32> to vector<128x256xbf16>
    %c0_2 = arith.constant 0 : index
    %c0_3 = arith.constant 0 : index
    %10 = vector.load %arg2[%c0_2, %c0_3] : memref<128x256xbf16, #tpu.memory_space<vmem>>, vector<128x256xbf16>
    tpu.vector_store %arg2[%c0_2, %c0_3], %9 {strides = array<i32>} : memref<128x256xbf16, #tpu.memory_space<vmem>>, vector<128x256xbf16>,
    return
  }
  func.func @transform_0(%arg0: i32) -> (i32, i32) {
    %c0_i32 = arith.constant 0 : i32
    %c0_i32_0 = arith.constant 0 : i32
    return %arg0, %c0_i32 : i32, i32
  }
  func.func @transform_1(%arg0: i32) -> (i32, i32) {
    %c0_i32 = arith.constant 0 : i32
    %c0_i32_0 = arith.constant 0 : i32
    return %arg0, %c0_i32 : i32, i32
  }
}

</mosaic_0001>

<llo_original>
// kernel: tpu_custom_call.1
$region0: #{tpu_custom_call.1}
  #allocation0 [shape = 'u32[]', space=smem, size = 0x4, offset = 0x4, fixed_abs, tag = 'smem constant byte address 0x4 - core index']
  #allocation1 [shape = 'u32[144,128]{1,0:T(1,128)}', space=vmem, size = 0x12000, scoped, tag = 'internal scratch']
  %s0 = inlined_call_operand.hbm [shape: f32[128,256], index: 0, kind: input, shape index: {}]
  %s1 = inlined_call_operand.hbm [shape: bf16[128,256], index: 1, kind: output, shape index: {}]
  %s2 = sld [smem:[#allocation0]]
  $region18: #{tpu_custom_call.1} parent=0
    _
  %s4 = ssub.s32 1, %s2
  %s5 = scalar_select 0, %s4, %s2
  $region1: #{tpu_custom_call.1} parent=0
    #allocation2 [shape = 'u8[131072]{0}', space=vmem, size = 0x20000, scoped, tag = 'input window, operand 0, single buffered']
    #allocation3 [shape = 's32[1]{0}', space=sflag, size = 0x4, scoped, tag = 'scoped memory for tpu_custom_call.1']
    #allocation4 [shape = 's32[1]{0}', space=sflag, size = 0x4, scoped, tag = 'scoped memory for tpu_custom_call.1']
    #allocation5 [shape = 'u8[65536]{0}', space=vmem, size = 0x10000, scoped, tag = 'output window, operand 0, single buffered']
    %6 = vsyncpa [#allocation3], 0
    %7 = vsyncpa [#allocation4], 0
    // Predicated region
    $region2: #{tpu_custom_call.1} parent=1 // pred_check
      _
    $region3: #{tpu_custom_call.1} parent=1 // pred_check_branch
      %9 = sbr.rel (0) target = $region5
    $region4: #{tpu_custom_call.1} parent=1 // pred_region
      %s11 = ssub.s32 4096, 4096
      %12 = vsyncadd [#allocation3], %s11
      %s13 = sshll.u32 [#allocation2], 4
      %s14 = int_to_ptr.vmem [resolvable:$true] %s13
      %19 = dma.hbm_to_vmem [thread:$0]  %s0, 4096, %s14, [#allocation3], 256, 256, 16
    $region5: #{tpu_custom_call.1} parent=1 // pred_fallthru
      _
    // Predicated region
    $region6: #{tpu_custom_call.1} parent=1 // pred_check
      _
    $region7: #{tpu_custom_call.1} parent=1 // pred_check_branch
      %21 = sbr.rel (0) target = $region9
    $region8: #{tpu_custom_call.1} parent=1 // pred_region
      %22 = dma.done [#allocation3], 4096
    $region9: #{tpu_custom_call.1} parent=1 // pred_fallthru
      _
    %v23 = vld [vmem:[#allocation2] sm:$0xff]
    %v24 = vld [vmem:[#allocation2 + $0x8] sm:$0xff]
    %v25 = vld [vmem:[#allocation2 + $0x10] sm:$0xff]
    %v26 = vld [vmem:[#allocation2 + $0x18] sm:$0xff]
    %v27 = vld [vmem:[#allocation2 + $0x20] sm:$0xff]
    %v28 = vld [vmem:[#allocation2 + $0x28] sm:$0xff]
    %v29 = vld [vmem:[#allocation2 + $0x30] sm:$0xff]
    %v30 = vld [vmem:[#allocation2 + $0x38] sm:$0xff]
    %v31 = vld [vmem:[#allocation2 + $0x40] sm:$0xff]
    %v32 = vld [vmem:[#allocation2 + $0x48] sm:$0xff]
    %v33 = vld [vmem:[#allocation2 + $0x50] sm:$0xff]
    %v34 = vld [vmem:[#allocation2 + $0x58] sm:$0xff]
    %v35 = vld [vmem:[#allocation2 + $0x60] sm:$0xff]
    %v36 = vld [vmem:[#allocation2 + $0x68] sm:$0xff]
    %v37 = vld [vmem:[#allocation2 + $0x70] sm:$0xff]
    %v38 = vld [vmem:[#allocation2 + $0x78] sm:$0xff]
    %v39 = vld [vmem:[#allocation2 + $0x80] sm:$0xff]
    %v40 = vld [vmem:[#allocation2 + $0x88] sm:$0xff]
    %v41 = vld [vmem:[#allocation2 + $0x90] sm:$0xff]
    %v42 = vld [vmem:[#allocation2 + $0x98] sm:$0xff]
    %v43 = vld [vmem:[#allocation2 + $0xa0] sm:$0xff]
    %v44 = vld [vmem:[#allocation2 + $0xa8] sm:$0xff]
    %v45 = vld [vmem:[#allocation2 + $0xb0] sm:$0xff]
    %v46 = vld [vmem:[#allocation2 + $0xb8] sm:$0xff]
    %v47 = vld [vmem:[#allocation2 + $0xc0] sm:$0xff]
    %v48 = vld [vmem:[#allocation2 + $0xc8] sm:$0xff]
    %v49 = vld [vmem:[#allocation2 + $0xd0] sm:$0xff]
    %v50 = vld [vmem:[#allocation2 + $0xd8] sm:$0xff]
    %v51 = vld [vmem:[#allocation2 + $0xe0] sm:$0xff]
    %v52 = vld [vmem:[#allocation2 + $0xe8] sm:$0xff]
    %v53 = vld [vmem:[#allocation2 + $0xf0] sm:$0xff]
    %v54 = vld [vmem:[#allocation2 + $0xf8] sm:$0xff]
    %v55 = vmul.f32 %v23, %v23
    %v56 = vmul.f32 %v24, %v24
    %v57 = vmul.f32 %v25, %v25
    %v58 = vmul.f32 %v26, %v26
    %v59 = vmul.f32 %v27, %v27
    %v60 = vmul.f32 %v28, %v28
    %v61 = vmul.f32 %v29, %v29
    %v62 = vmul.f32 %v30, %v30
    %v63 = vmul.f32 %v31, %v31
    %v64 = vmul.f32 %v32, %v32
    %v65 = vmul.f32 %v33, %v33
    %v66 = vmul.f32 %v34, %v34
    %v67 = vmul.f32 %v35, %v35
    %v68 = vmul.f32 %v36, %v36
    %v69 = vmul.f32 %v37, %v37
    %v70 = vmul.f32 %v38, %v38
    %v71 = vmul.f32 %v39, %v39
    %v72 = vmul.f32 %v40, %v40
    %v73 = vmul.f32 %v41, %v41
    %v74 = vmul.f32 %v42, %v42
    %v75 = vmul.f32 %v43, %v43
    %v76 = vmul.f32 %v44, %v44
    %v77 = vmul.f32 %v45, %v45
    %v78 = vmul.f32 %v46, %v46
    %v79 = vmul.f32 %v47, %v47
    %v80 = vmul.f32 %v48, %v48
    %v81 = vmul.f32 %v49, %v49
    %v82 = vmul.f32 %v50, %v50
    %v83 = vmul.f32 %v51, %v51
    %v84 = vmul.f32 %v52, %v52
    %v85 = vmul.f32 %v53, %v53
    %v86 = vmul.f32 %v54, %v54
    %v87 = vadd.f32 %v55, %v56
    %88 = vadd.xlane.f32.xlu0 %v87
    %v89 = vpop.xlane.xlu0 %88
    %v90 = vadd.f32 %v57, %v58
    %91 = vadd.xlane.f32.xlu0 %v90
    %v92 = vpop.xlane.xlu0 %91
    %v93 = vadd.f32 %v59, %v60
    %94 = vadd.xlane.f32.xlu0 %v93
    %v95 = vpop.xlane.xlu0 %94
    %v96 = vadd.f32 %v61, %v62
    %97 = vadd.xlane.f32.xlu0 %v96
    %v98 = vpop.xlane.xlu0 %97
    %v99 = vadd.f32 %v63, %v64
    %100 = vadd.xlane.f32.xlu0 %v99
    %v101 = vpop.xlane.xlu0 %100
    %v102 = vadd.f32 %v65, %v66
    %103 = vadd.xlane.f32.xlu0 %v102
    %v104 = vpop.xlane.xlu0 %103
    %v105 = vadd.f32 %v67, %v68
    %106 = vadd.xlane.f32.xlu0 %v105
    %v107 = vpop.xlane.xlu0 %106
    %v108 = vadd.f32 %v69, %v70
    %109 = vadd.xlane.f32.xlu0 %v108
    %v110 = vpop.xlane.xlu0 %109
    %v111 = vadd.f32 %v71, %v72
    %112 = vadd.xlane.f32.xlu0 %v111
    %v113 = vpop.xlane.xlu0 %112
    %v114 = vadd.f32 %v73, %v74
    %115 = vadd.xlane.f32.xlu0 %v114
    %v116 = vpop.xlane.xlu0 %115
    %v117 = vadd.f32 %v75, %v76
    %118 = vadd.xlane.f32.xlu0 %v117
    %v119 = vpop.xlane.xlu0 %118
    %v120 = vadd.f32 %v77, %v78
    %121 = vadd.xlane.f32.xlu0 %v120
    %v122 = vpop.xlane.xlu0 %121
    %v123 = vadd.f32 %v79, %v80
    %124 = vadd.xlane.f32.xlu0 %v123
    %v125 = vpop.xlane.xlu0 %124
    %v126 = vadd.f32 %v81, %v82
    %127 = vadd.xlane.f32.xlu0 %v126
    %v128 = vpop.xlane.xlu0 %127
    %v129 = vadd.f32 %v83, %v84
    %130 = vadd.xlane.f32.xlu0 %v129
    %v131 = vpop.xlane.xlu0 %130
    %v132 = vadd.f32 %v85, %v86
    %133 = vadd.xlane.f32.xlu0 %v132
    %v134 = vpop.xlane.xlu0 %133
    %v135 = vmax.f32 %v89, 1e-24
    %v136 = vmax.f32 %v92, 1e-24
    %v137 = vmax.f32 %v95, 1e-24
    %v138 = vmax.f32 %v98, 1e-24
    %v139 = vmax.f32 %v101, 1e-24
    %v140 = vmax.f32 %v104, 1e-24
    %v141 = vmax.f32 %v107, 1e-24
    %v142 = vmax.f32 %v110, 1e-24
    %v143 = vmax.f32 %v113, 1e-24
    %v144 = vmax.f32 %v116, 1e-24
    %v145 = vmax.f32 %v119, 1e-24
    %v146 = vmax.f32 %v122, 1e-24
    %v147 = vmax.f32 %v125, 1e-24
    %v148 = vmax.f32 %v128, 1e-24
    %v149 = vmax.f32 %v131, 1e-24
    %v150 = vmax.f32 %v134, 1e-24
    %v151 = vrsqrt.pop %v135
    %v152 = vrsqrt.pop %v136
    %v153 = vrsqrt.pop %v137
    %v154 = vrsqrt.pop %v138
    %v155 = vrsqrt.pop %v139
    %v156 = vrsqrt.pop %v140
    %v157 = vrsqrt.pop %v141
    %v158 = vrsqrt.pop %v142
    %v159 = vrsqrt.pop %v143
    %v160 = vrsqrt.pop %v144
    %v161 = vrsqrt.pop %v145
    %v162 = vrsqrt.pop %v146
    %v163 = vrsqrt.pop %v147
    %v164 = vrsqrt.pop %v148
    %v165 = vrsqrt.pop %v149
    %v166 = vrsqrt.pop %v150
    %v167 = vmul.f32 %v23, %v151
    %v168 = vmul.f32 %v24, %v151
    %v169 = vmul.f32 %v25, %v152
    %v170 = vmul.f32 %v26, %v152
    %v171 = vmul.f32 %v27, %v153
    %v172 = vmul.f32 %v28, %v153
    %v173 = vmul.f32 %v29, %v154
    %v174 = vmul.f32 %v30, %v154
    %v175 = vmul.f32 %v31, %v155
    %v176 = vmul.f32 %v32, %v155
    %v177 = vmul.f32 %v33, %v156
    %v178 = vmul.f32 %v34, %v156
    %v179 = vmul.f32 %v35, %v157
    %v180 = vmul.f32 %v36, %v157
    %v181 = vmul.f32 %v37, %v158
    %v182 = vmul.f32 %v38, %v158
    %v183 = vmul.f32 %v39, %v159
    %v184 = vmul.f32 %v40, %v159
    %v185 = vmul.f32 %v41, %v160
    %v186 = vmul.f32 %v42, %v160
    %v187 = vmul.f32 %v43, %v161
    %v188 = vmul.f32 %v44, %v161
    %v189 = vmul.f32 %v45, %v162
    %v190 = vmul.f32 %v46, %v162
    %v191 = vmul.f32 %v47, %v163
    %v192 = vmul.f32 %v48, %v163
    %v193 = vmul.f32 %v49, %v164
    %v194 = vmul.f32 %v50, %v164
    %v195 = vmul.f32 %v51, %v165
    %v196 = vmul.f32 %v52, %v165
    %v197 = vmul.f32 %v53, %v166
    %v198 = vmul.f32 %v54, %v166
    %v199 = vpack.c.bf16 %v169, %v167
    %v200 = vpack.c.bf16 %v170, %v168
    %v201 = vpack.c.bf16 %v173, %v171
    %v202 = vpack.c.bf16 %v174, %v172
    %v203 = vpack.c.bf16 %v177, %v175
    %v204 = vpack.c.bf16 %v178, %v176
    %v205 = vpack.c.bf16 %v181, %v179
    %v206 = vpack.c.bf16 %v182, %v180
    %v207 = vpack.c.bf16 %v185, %v183
    %v208 = vpack.c.bf16 %v186, %v184
    %v209 = vpack.c.bf16 %v189, %v187
    %v210 = vpack.c.bf16 %v190, %v188
    %v211 = vpack.c.bf16 %v193, %v191
    %v212 = vpack.c.bf16 %v194, %v192
    %v213 = vpack.c.bf16 %v197, %v195
    %v214 = vpack.c.bf16 %v198, %v196
    %v231 = vunpack.c.l.b16 %v199
    %v232 = vunpack.c.l.b16 %v200
    %v233 = vunpack.c.h.b16 %v199
    %v234 = vunpack.c.h.b16 %v200
    %v235 = vunpack.c.l.b16 %v201
    %v236 = vunpack.c.l.b16 %v202
    %v237 = vunpack.c.h.b16 %v201
    %v238 = vunpack.c.h.b16 %v202
    %v239 = vunpack.c.l.b16 %v203
    %v240 = vunpack.c.l.b16 %v204
    %v241 = vunpack.c.h.b16 %v203
    %v242 = vunpack.c.h.b16 %v204
    %v243 = vunpack.c.l.b16 %v205
    %v244 = vunpack.c.l.b16 %v206
    %v245 = vunpack.c.h.b16 %v205
    %v246 = vunpack.c.h.b16 %v206
    %v247 = vunpack.c.l.b16 %v207
    %v248 = vunpack.c.l.b16 %v208
    %v249 = vunpack.c.h.b16 %v207
    %v250 = vunpack.c.h.b16 %v208
    %v251 = vunpack.c.l.b16 %v209
    %v252 = vunpack.c.l.b16 %v210
    %v253 = vunpack.c.h.b16 %v209
    %v254 = vunpack.c.h.b16 %v210
    %v255 = vunpack.c.l.b16 %v211
    %v256 = vunpack.c.l.b16 %v212
    %v257 = vunpack.c.h.b16 %v211
    %v258 = vunpack.c.h.b16 %v212
    %v259 = vunpack.c.l.b16 %v213
    %v260 = vunpack.c.l.b16 %v214
    %v261 = vunpack.c.h.b16 %v213
    %v262 = vunpack.c.h.b16 %v214
    %v263 = vpack.c.b16 %v232, %v231
    %v264 = vpack.c.b16 %v234, %v233
    %v265 = vpack.c.b16 %v236, %v235
    %v266 = vpack.c.b16 %v238, %v237
    %v267 = vpack.c.b16 %v240, %v239
    %v268 = vpack.c.b16 %v242, %v241
    %v269 = vpack.c.b16 %v244, %v243
    %v270 = vpack.c.b16 %v246, %v245
    %v271 = vpack.c.b16 %v248, %v247
    %v272 = vpack.c.b16 %v250, %v249
    %v273 = vpack.c.b16 %v252, %v251
    %v274 = vpack.c.b16 %v254, %v253
    %v275 = vpack.c.b16 %v256, %v255
    %v276 = vpack.c.b16 %v258, %v257
    %v277 = vpack.c.b16 %v260, %v259
    %v278 = vpack.c.b16 %v262, %v261
    %295 = vst [vmem:[#allocation5] sm:$0xff] %v263
    %296 = vst [vmem:[#allocation5 + $0x8] sm:$0xff] %v264
    %297 = vst [vmem:[#allocation5 + $0x10] sm:$0xff] %v265
    %298 = vst [vmem:[#allocation5 + $0x18] sm:$0xff] %v266
    %299 = vst [vmem:[#allocation5 + $0x20] sm:$0xff] %v267
    %300 = vst [vmem:[#allocation5 + $0x28] sm:$0xff] %v268
    %301 = vst [vmem:[#allocation5 + $0x30] sm:$0xff] %v269
    %302 = vst [vmem:[#allocation5 + $0x38] sm:$0xff] %v270
    %303 = vst [vmem:[#allocation5 + $0x40] sm:$0xff] %v271
    %304 = vst [vmem:[#allocation5 + $0x48] sm:$0xff] %v272
    %305 = vst [vmem:[#allocation5 + $0x50] sm:$0xff] %v273
    %306 = vst [vmem:[#allocation5 + $0x58] sm:$0xff] %v274
    %307 = vst [vmem:[#allocation5 + $0x60] sm:$0xff] %v275
    %308 = vst [vmem:[#allocation5 + $0x68] sm:$0xff] %v276
    %309 = vst [vmem:[#allocation5 + $0x70] sm:$0xff] %v277
    %310 = vst [vmem:[#allocation5 + $0x78] sm:$0xff] %v278
    // Predicated region
    $region10: #{tpu_custom_call.1} parent=1 // pred_check
      _
    $region11: #{tpu_custom_call.1} parent=1 // pred_check_branch
      %312 = sbr.rel (0) target = $region13
    $region12: #{tpu_custom_call.1} parent=1 // pred_region
      %s314 = ssub.s32 2048, 2048
      %315 = vsyncadd [#allocation4], %s314
      %s316 = sshll.u32 [#allocation5], 4
      %s317 = int_to_ptr.vmem [resolvable:$true] %s316
      %322 = dma.vmem_to_hbm [thread:$0]  %s317, 2048, %s1, [#allocation4], 128, 128, 8
    $region13: #{tpu_custom_call.1} parent=1 // pred_fallthru
      _
    // Predicated region
    $region14: #{tpu_custom_call.1} parent=1 // pred_check
      _
    $region15: #{tpu_custom_call.1} parent=1 // pred_check_branch
      %324 = sbr.rel (0) target = $region17
    $region16: #{tpu_custom_call.1} parent=1 // pred_region
      %325 = dma.done [#allocation4], 2048
    $region17: #{tpu_custom_call.1} parent=1 // pred_fallthru
      _
    %326 = vsyncpa [#allocation3], 1
    %327 = vsyncpa [#allocation4], 1

</llo_original>
